<compile_context>
chip_gen: v7x
topology: tpu7x:2x2x1
jax: 0.10.0
libtpu: 0.0.40
codegen_flags: <defaults>
</compile_context>

<pallas_src>
import jax
import jax.numpy as jnp
from jax import lax
from jax.experimental import pallas as pl
from jax.experimental.pallas import tpu as pltpu


def _write_intervals(min_ref, max_ref, interval_ref, mult):
    """interval_ref[...] = min + (max - min) * (i / N) as one (1, N, TS) slab.

    Computing the whole block at once keeps the VPU and the store path running
    on full (8, 128) vregs instead of single-sublane rows.
    """
    min_d = min_ref[...]                                   # (1, 1, TS)
    step = (max_ref[...] - min_d) * jnp.float32(mult)      # (1, 1, TS)
    idx = lax.broadcasted_iota(jnp.int32, interval_ref.shape, 1)
    interval_ref[...] = min_d + step * idx.astype(jnp.float32)


def _make_tpu_kernel(n_intervals):
    mult = 1.0 / n_intervals

    def kernel(seed_ref, min_ref, max_ref, noise_ref, interval_ref):
        b = pl.program_id(0)
        t = pl.program_id(1)

        # --- uniform [0, 1) noise via hardware PRNG, reseeded per (b, t) ----
        pltpu.prng_seed(seed_ref[0], b, t)
        bits = pltpu.bitcast(pltpu.prng_random_bits(noise_ref.shape),
                             jnp.uint32)
        # Mantissa trick: build a float in [1, 2) then subtract 1 -> [0, 1).
        mantissa = (bits >> jnp.uint32(9)) | jnp.uint32(0x3F800000)
        noise_ref[...] = pltpu.bitcast(mantissa, jnp.float32) - jnp.float32(1.0)

        # --- interval minimum disparities -----------------------------------
        _write_intervals(min_ref, max_ref, interval_ref, mult)

    return kernel


def _make_portable_kernel(n_intervals):
    mult = 1.0 / n_intervals

    def kernel(seed_ref, bits_ref, min_ref, max_ref, noise_ref, interval_ref):
        del seed_ref  # bits are precomputed on non-TPU backends
        bits = bits_ref[...]                                    # uint32
        noise_ref[...] = ((bits >> jnp.uint32(8)).astype(jnp.float32)
                          * jnp.float32(1.0 / (1 << 24)))
        _write_intervals(min_ref, max_ref, interval_ref, mult)

    return kernel


def disparity_initialization(min_disparity, max_disparity,
                             number_of_intervals=10, seed=0):
    """JAX/Pallas equivalent of DisparityInitialization.forward."""
    B, C, H, W = min_disparity.shape
    assert C == 1 and max_disparity.shape == min_disparity.shape
    N = int(number_of_intervals)
    multiplier = 1.0 / N
    HW = H * W

    # Flatten spatial dims -> lane-dense output slab (free row-major reshape).
    min_flat = min_disparity.reshape(B, 1, HW).astype(jnp.float32)
    max_flat = max_disparity.reshape(B, 1, HW).astype(jnp.float32)

    on_tpu = jax.default_backend() == "tpu"

    # Spatial tile: biggest multiple of 128 whose double-buffered per-step
    # footprint (outputs + inputs, 2 buffers each) stays within a conservative
    # budget -> fits v5e's 16 MiB default scoped VMEM and v7x's 64 MiB VMEM
    # without touching vmem_limit_bytes.
    vmem_budget = 8 * 1024 * 1024
    out_lanes = 2 * N                       # noise + interval, f32, N rows
    in_lanes = 2 if on_tpu else (2 + N)     # min,max (+precomputed bits)
    bytes_per_lane = (out_lanes + in_lanes) * 4 * 2   # double-buffered
    ts_cap = max(128, (vmem_budget // bytes_per_lane) // 128 * 128)
    if HW <= ts_cap:
        TS, n_tiles = HW, 1                        # full extent (always legal)
    else:
        TS, n_tiles = ts_cap, pl.cdiv(HW, ts_cap)  # mult. of 128, padded tail

    out_shape = (
        jax.ShapeDtypeStruct((B, N, HW), jnp.float32),   # noise
        jax.ShapeDtypeStruct((B, N, HW), jnp.float32),   # interval_min
    )
    out_spec = pl.BlockSpec((1, N, TS), lambda b, t, seed: (b, 0, t))
    minmax_spec = pl.BlockSpec((1, 1, TS), lambda b, t, seed: (b, 0, t))
    compiler_params = pltpu.CompilerParams(
        dimension_semantics=("parallel", "parallel"))     # megacore on v7x
    seed_arr = jnp.array([seed], dtype=jnp.int32)

    if on_tpu:
        grid_spec = pltpu.PrefetchScalarGridSpec(
            num_scalar_prefetch=1,                 # seed lands in SMEM
            grid=(B, n_tiles),
            in_specs=[minmax_spec, minmax_spec],
            out_specs=(out_spec, out_spec),
        )
        noise, interval_min = pl.pallas_call(
            _make_tpu_kernel(N),
            out_shape=out_shape,
            grid_spec=grid_spec,
            compiler_params=compiler_params,
        )(seed_arr, min_flat, max_flat)
    else:
        # TODO(synk): pltpu.prng_seed/prng_random_bits have no CPU/interpret
        # lowering; feed precomputed random bits on non-TPU backends.
        key = jax.random.fold_in(jax.random.PRNGKey(0), seed)
        bits = jax.random.bits(key, (B, N, HW), dtype=jnp.uint32)
        bits_spec = pl.BlockSpec((1, N, TS), lambda b, t, seed: (b, 0, t))
        grid_spec = pltpu.PrefetchScalarGridSpec(
            num_scalar_prefetch=1,
            grid=(B, n_tiles),
            in_specs=[bits_spec, minmax_spec, minmax_spec],
            out_specs=(out_spec, out_spec),
        )
        noise, interval_min = pl.pallas_call(
            _make_portable_kernel(N),
            out_shape=out_shape,
            grid_spec=grid_spec,
            compiler_params=compiler_params,
        )(seed_arr, bits, min_flat, max_flat)

    noise = noise.reshape(B, N, H, W)
    interval_min = interval_min.reshape(B, N, H, W)
    return noise, interval_min, multiplier


if __name__ == "__main__":
    key = jax.random.PRNGKey(0)
    k1, k2 = jax.random.split(key)

    B, H, W = 2, 16, 16
    N = 10
    min_disp = jax.random.uniform(k1, (B, 1, H, W), jnp.float32, 0.0, 32.0)
    max_disp = min_disp + jax.random.uniform(k2, (B, 1, H, W), jnp.float32,
                                             8.0, 64.0)

    noise, interval_min, mult = disparity_initialization(
        min_disp, max_disp, number_of_intervals=N, seed=0)
    jax.block_until_ready((noise, interval_min))

    assert noise.shape == (B, N, H, W)
    assert interval_min.shape == (B, N, H, W)

    # Reference check for the deterministic part.
    range_mult = jnp.array([i * mult for i in range(N)],
                           dtype=jnp.float32).reshape(1, N, 1, 1)
    expected = min_disp + (max_disp - min_disp) * range_mult
    assert jnp.allclose(interval_min, expected, atol=1e-4)
    assert bool((noise >= 0.0).all()) and bool((noise < 1.0).all())
    assert abs(mult - 1.0 / N) < 1e-12

    print("KERNEL_OK")
</pallas_src>

<mosaic_0001>
module attributes {stable_mosaic.version = 11 : i64} {
  func.func @kernel(%arg0: i32, %arg1: i32, %arg2: memref<1xi32, #tpu.memory_space<smem>>, %arg3: memref<1x10x256xi32, #tpu.memory_space<vmem>>, %arg4: memref<1x1x256xf32, #tpu.memory_space<vmem>>, %arg5: memref<1x1x256xf32, #tpu.memory_space<vmem>>, %arg6: memref<1x10x256xf32, #tpu.memory_space<vmem>>, %arg7: memref<1x10x256xf32, #tpu.memory_space<vmem>>) attributes {dimension_semantics = [#tpu.dimension_semantics<parallel>, #tpu.dimension_semantics<parallel>], iteration_bounds = array<i64: 2, 1>, scalar_prefetch = 1 : i64, scratch_operands = 0 : i64, tpu.core_type = #tpu.core_type<tc>, window_params = [{transform_indices = @transform_0, window_bounds = array<i64: 1, 10, 256>}, {transform_indices = @transform_1, window_bounds = array<i64: 1, 1, 256>}, {transform_indices = @transform_2, window_bounds = array<i64: 1, 1, 256>}, {transform_indices = @transform_3, window_bounds = array<i64: 1, 10, 256>}, {transform_indices = @transform_4, window_bounds = array<i64: 1, 10, 256>}]} {
    %c0 = arith.constant 0 : index
    %c0_0 = arith.constant 0 : index
    %c0_1 = arith.constant 0 : index
    %0 = vector.load %arg3[%c0, %c0_0, %c0_1] : memref<1x10x256xi32, #tpu.memory_space<vmem>>, vector<1x10x256xi32>
    %c8_i32 = arith.constant 8 : i32
    %1 = vector.broadcast %c8_i32 : i32 to vector<1x10x256xi32>
    %2 = arith.shrui %0, %1 : vector<1x10x256xi32>
    %3 = arith.uitofp %2 : vector<1x10x256xi32> to vector<1x10x256xf32>
    %cst = arith.constant 5.96046448E-8 : f32
    %4 = vector.broadcast %cst : f32 to vector<1x10x256xf32>
    %5 = arith.mulf %3, %4 : vector<1x10x256xf32>
    %c0_2 = arith.constant 0 : index
    %c0_3 = arith.constant 0 : index
    %c0_4 = arith.constant 0 : index
    %6 = vector.load %arg6[%c0_2, %c0_3, %c0_4] : memref<1x10x256xf32, #tpu.memory_space<vmem>>, vector<1x10x256xf32>
    tpu.vector_store %arg6[%c0_2, %c0_3, %c0_4], %5 {strides = array<i32>} : memref<1x10x256xf32, #tpu.memory_space<vmem>>, vector<1x10x256xf32>,
    %c0_5 = arith.constant 0 : index
    %c0_6 = arith.constant 0 : index
    %c0_7 = arith.constant 0 : index
    %7 = vector.load %arg4[%c0_5, %c0_6, %c0_7] : memref<1x1x256xf32, #tpu.memory_space<vmem>>, vector<1x1x256xf32>
    %c0_8 = arith.constant 0 : index
    %c0_9 = arith.constant 0 : index
    %c0_10 = arith.constant 0 : index
    %8 = vector.load %arg5[%c0_8, %c0_9, %c0_10] : memref<1x1x256xf32, #tpu.memory_space<vmem>>, vector<1x1x256xf32>
    %9 = arith.subf %8, %7 : vector<1x1x256xf32>
    %cst_11 = arith.constant 1.000000e-01 : f32
    %10 = vector.broadcast %cst_11 : f32 to vector<1x1x256xf32>
    %11 = arith.mulf %9, %10 : vector<1x1x256xf32>
    %12 = tpu.iota {dimensions = array<i32: 1>} : vector<1x10x256xi32>
    %13 = arith.sitofp %12 : vector<1x10x256xi32> to vector<1x10x256xf32>
    %14 = vector.broadcast %11 : vector<1x1x256xf32> to vector<1x10x256xf32>
    %15 = arith.mulf %14, %13 : vector<1x10x256xf32>
    %16 = vector.broadcast %7 : vector<1x1x256xf32> to vector<1x10x256xf32>
    %17 = arith.addf %16, %15 : vector<1x10x256xf32>
    %c0_12 = arith.constant 0 : index
    %c0_13 = arith.constant 0 : index
    %c0_14 = arith.constant 0 : index
    %18 = vector.load %arg7[%c0_12, %c0_13, %c0_14] : memref<1x10x256xf32, #tpu.memory_space<vmem>>, vector<1x10x256xf32>
    tpu.vector_store %arg7[%c0_12, %c0_13, %c0_14], %17 {strides = array<i32>} : memref<1x10x256xf32, #tpu.memory_space<vmem>>, vector<1x10x256xf32>,
    return
  }
  func.func @transform_0(%arg0: i32, %arg1: i32, %arg2: memref<1xi32, #tpu.memory_space<smem>>) -> (i32, i32, i32) {
    %c0_i32 = arith.constant 0 : i32
    %c0_i32_0 = arith.constant 0 : i32
    return %arg0, %c0_i32, %arg1 : i32, i32, i32
  }
  func.func @transform_1(%arg0: i32, %arg1: i32, %arg2: memref<1xi32, #tpu.memory_space<smem>>) -> (i32, i32, i32) {
    %c0_i32 = arith.constant 0 : i32
    %c0_i32_0 = arith.constant 0 : i32
    return %arg0, %c0_i32, %arg1 : i32, i32, i32
  }
  func.func @transform_2(%arg0: i32, %arg1: i32, %arg2: memref<1xi32, #tpu.memory_space<smem>>) -> (i32, i32, i32) {
    %c0_i32 = arith.constant 0 : i32
    %c0_i32_0 = arith.constant 0 : i32
    return %arg0, %c0_i32, %arg1 : i32, i32, i32
  }
  func.func @transform_3(%arg0: i32, %arg1: i32, %arg2: memref<1xi32, #tpu.memory_space<smem>>) -> (i32, i32, i32) {
    %c0_i32 = arith.constant 0 : i32
    %c0_i32_0 = arith.constant 0 : i32
    return %arg0, %c0_i32, %arg1 : i32, i32, i32
  }
  func.func @transform_4(%arg0: i32, %arg1: i32, %arg2: memref<1xi32, #tpu.memory_space<smem>>) -> (i32, i32, i32) {
    %c0_i32 = arith.constant 0 : i32
    %c0_i32_0 = arith.constant 0 : i32
    return %arg0, %c0_i32, %arg1 : i32, i32, i32
  }
}

</mosaic_0001>

<llo_original>
// kernel: tpu_custom_call.1
$region0: #{tpu_custom_call.1}
  #allocation0 [shape = 'u32[]', space=smem, size = 0x4, offset = 0x4, fixed_abs, tag = 'smem constant byte address 0x4 - core index']
  #allocation1 [shape = 'u32[144,128]{1,0:T(1,128)}', space=vmem, size = 0x12000, scoped, tag = 'internal scratch']
  #allocation2 [shape = 's32[1]{0}', space=sflag, size = 0x4, scoped, tag = 'scoped memory for tpu_custom_call.1']
  #allocation3 [shape = 's32[1]{0:T(128)S(6)}', space=smem, size = 0x200, scoped, tag = 'prefetched SMEM operand 0']
  %s0 = inlined_call_operand.<no memory space> [shape: s32[1], index: 0, kind: input, shape index: {}]
  %s1 = inlined_call_operand.vmem [shape: u32[2,10,256], index: 1, kind: input, shape index: {}]
  %s2 = inlined_call_operand.vmem [shape: f32[2,1,256], index: 2, kind: input, shape index: {}]
  %s3 = inlined_call_operand.vmem [shape: f32[2,1,256], index: 3, kind: input, shape index: {}]
  %s4 = inlined_call_operand.vmem [shape: f32[2,10,256], index: 4, kind: output, shape index: {0}]
  %s5 = inlined_call_operand.vmem [shape: f32[2,10,256], index: 5, kind: output, shape index: {1}]
  %6 = xla_tuple %s4, %s5
  %s7 = sld [smem:[#allocation0]]
  $region53: #{tpu_custom_call.1} parent=0
    _
  %s9 = ssub.s32 1, %s7
  %s10 = scalar_select 0, %s9, %s7
  %11 = sst [smem:[#allocation3]] %s0
  loop: start=0, step=1, limit=4
  $region2: #{tpu_custom_call.1} parent=0 // loop_pre_header
    _
  $region3: #{tpu_custom_call.1} parent=0 // loop_header
    %s13 = sphi 0, %s17
    %p14 = scmp.ge.s32.totalorder %s13, 4
    %s20 = sphi 0, %s32
    %s21 = sphi 0, %s28
    %s22 = sphi 0, %s20
    %s23 = sphi 0, %s21
    %s24 = sphi 0, %s22
    %s25 = sphi 0, %s23
    %s37 = sphi 0, %s39
    %s40 = sphi 0, %s37
    %s41 = sphi 0, %s40
    %s57 = sphi 0, %s41
    %s65 = sphi 0, %s67
    %s68 = sphi 0, %s65
    %s69 = sphi 0, %s68
    %s85 = sphi 0, %s69
    %s93 = sphi 0, %s95
    %s96 = sphi 0, %s93
    %s97 = sphi 0, %s96
    %s113 = sphi 0, %s97
    %s121 = sphi 0, %s123
    %s124 = sphi 0, %s121
    %s125 = sphi 0, %s124
    %s141 = sphi 0, %s125
    %s149 = sphi 0, %s151
    %s152 = sphi 0, %s149
    %s153 = sphi 0, %s152
    %s169 = sphi 0, %s153
  $region4: #{tpu_custom_call.1} parent=0 // loop_header_branch
    %16 = sbr.rel (%p14) target = $region8
  $region5: #{tpu_custom_call.1} parent=0 // loop_body
    %s18 = ssub.s32 %s13, 1
    %s19 = ssub.s32 %s13, 2
    %s26 = sadd.s32 1, %s21
    %p27 = scmp.ge.s32.totalorder %s26, 1
    %s28 = scalar_select %p27, 0, %s26
    %s29 = sadd.s32 1, %s20
    %s30 = scalar_select %p27, %s29, %s20
    %p31 = scmp.ge.s32.totalorder %s30, 2
    %s32 = scalar_select %p31, 0, %s30
    %s33 = ssub.s32 %s20, %s32
    %s34 = ssub.s32 %s21, %s28
    %s35 = sor.u32 %s33, %s34
    %p36 = scmp.eq.s32.totalorder %s35, 0
    %s38 = sadd.s32 %s37, 1
    %s39 = scalar_select %p36, %s37, %s38
    %p42 = pneg %p36
    %p43 = scmp.eq.s32.totalorder %s13, 1
    %p44 = por %p42, %p43
    %p45 = scmp.ne.s32.totalorder %s37, %s40
    %p46 = scmp.eq.s32.totalorder %s13, 0
    %p47 = por %p45, %p46
    %p48 = scmp.ne.s32.totalorder %s37, %s40
    %p49 = scmp.eq.s32.totalorder %s18, 1
    %p50 = por %p48, %p49
    %p51 = scmp.ne.s32.totalorder %s40, %s41
    %p52 = scmp.eq.s32.totalorder %s18, 0
    %p53 = por %p51, %p52
    %p54 = scmp.ne.s32.totalorder %s40, %s41
    %p55 = scmp.eq.s32.totalorder %s19, 1
    %p56 = por %p54, %p55
    %p58 = scmp.ne.s32.totalorder %s41, %s57
    %p59 = scmp.eq.s32.totalorder %s19, 0
    %p60 = por %p58, %p59
    %s61 = ssub.s32 %s20, %s32
    %s62 = ssub.s32 %s21, %s28
    %s63 = sor.u32 %s61, %s62
    %p64 = scmp.eq.s32.totalorder %s63, 0
    %s66 = sadd.s32 %s65, 1
    %s67 = scalar_select %p64, %s65, %s66
    %p70 = pneg %p64
    %p71 = scmp.eq.s32.totalorder %s13, 1
    %p72 = por %p70, %p71
    %p73 = scmp.ne.s32.totalorder %s65, %s68
    %p74 = scmp.eq.s32.totalorder %s13, 0
    %p75 = por %p73, %p74
    %p76 = scmp.ne.s32.totalorder %s65, %s68
    %p77 = scmp.eq.s32.totalorder %s18, 1
    %p78 = por %p76, %p77
    %p79 = scmp.ne.s32.totalorder %s68, %s69
    %p80 = scmp.eq.s32.totalorder %s18, 0
    %p81 = por %p79, %p80
    %p82 = scmp.ne.s32.totalorder %s68, %s69
    %p83 = scmp.eq.s32.totalorder %s19, 1
    %p84 = por %p82, %p83
    %p86 = scmp.ne.s32.totalorder %s69, %s85
    %p87 = scmp.eq.s32.totalorder %s19, 0
    %p88 = por %p86, %p87
    %s89 = ssub.s32 %s20, %s32
    %s90 = ssub.s32 %s21, %s28
    %s91 = sor.u32 %s89, %s90
    %p92 = scmp.eq.s32.totalorder %s91, 0
    %s94 = sadd.s32 %s93, 1
    %s95 = scalar_select %p92, %s93, %s94
    %p98 = pneg %p92
    %p99 = scmp.eq.s32.totalorder %s13, 1
    %p100 = por %p98, %p99
    %p101 = scmp.ne.s32.totalorder %s93, %s96
    %p102 = scmp.eq.s32.totalorder %s13, 0
    %p103 = por %p101, %p102
    %p104 = scmp.ne.s32.totalorder %s93, %s96
    %p105 = scmp.eq.s32.totalorder %s18, 1
    %p106 = por %p104, %p105
    %p107 = scmp.ne.s32.totalorder %s96, %s97
    %p108 = scmp.eq.s32.totalorder %s18, 0
    %p109 = por %p107, %p108
    %p110 = scmp.ne.s32.totalorder %s96, %s97
    %p111 = scmp.eq.s32.totalorder %s19, 1
    %p112 = por %p110, %p111
    %p114 = scmp.ne.s32.totalorder %s97, %s113
    %p115 = scmp.eq.s32.totalorder %s19, 0
    %p116 = por %p114, %p115
    %s117 = ssub.s32 %s20, %s32
    %s118 = ssub.s32 %s21, %s28
    %s119 = sor.u32 %s117, %s118
    %p120 = scmp.eq.s32.totalorder %s119, 0
    %s122 = sadd.s32 %s121, 1
    %s123 = scalar_select %p120, %s121, %s122
    %p126 = pneg %p120
    %p127 = scmp.eq.s32.totalorder %s13, 1
    %p128 = por %p126, %p127
    %p129 = scmp.ne.s32.totalorder %s121, %s124
    %p130 = scmp.eq.s32.totalorder %s13, 0
    %p131 = por %p129, %p130
    %p132 = scmp.ne.s32.totalorder %s121, %s124
    %p133 = scmp.eq.s32.totalorder %s18, 1
    %p134 = por %p132, %p133
    %p135 = scmp.ne.s32.totalorder %s124, %s125
    %p136 = scmp.eq.s32.totalorder %s18, 0
    %p137 = por %p135, %p136
    %p138 = scmp.ne.s32.totalorder %s124, %s125
    %p139 = scmp.eq.s32.totalorder %s19, 1
    %p140 = por %p138, %p139
    %p142 = scmp.ne.s32.totalorder %s125, %s141
    %p143 = scmp.eq.s32.totalorder %s19, 0
    %p144 = por %p142, %p143
    %s145 = ssub.s32 %s20, %s32
    %s146 = ssub.s32 %s21, %s28
    %s147 = sor.u32 %s145, %s146
    %p148 = scmp.eq.s32.totalorder %s147, 0
    %s150 = sadd.s32 %s149, 1
    %s151 = scalar_select %p148, %s149, %s150
    %p154 = pneg %p148
    %p155 = scmp.eq.s32.totalorder %s13, 1
    %p156 = por %p154, %p155
    %p157 = scmp.ne.s32.totalorder %s149, %s152
    %p158 = scmp.eq.s32.totalorder %s13, 0
    %p159 = por %p157, %p158
    %p160 = scmp.ne.s32.totalorder %s149, %s152
    %p161 = scmp.eq.s32.totalorder %s18, 1
    %p162 = por %p160, %p161
    %p163 = scmp.ne.s32.totalorder %s152, %s153
    %p164 = scmp.eq.s32.totalorder %s18, 0
    %p165 = por %p163, %p164
    %p166 = scmp.ne.s32.totalorder %s152, %s153
    %p167 = scmp.eq.s32.totalorder %s19, 1
    %p168 = por %p166, %p167
    %p170 = scmp.ne.s32.totalorder %s153, %s169
    %p171 = scmp.eq.s32.totalorder %s19, 0
    %p172 = por %p170, %p171
    %p173 = scmp.le.s32.totalorder 1, %s13
    %p174 = scmp.lt.s32.totalorder %s13, 3
    %p175 = pnand %p173, %p174
    %p176 = pneg %p175
    // Predicated region
    $region9: #{tpu_custom_call.1} parent=5 // pred_check
      _
    $region10: #{tpu_custom_call.1} parent=5 // pred_check_branch
      %178 = sbr.rel (%p175) target = $region12
    $region11: #{tpu_custom_call.1} parent=5 // pred_region
      %s179 = ssub.s32 %s13, 1
    $region12: #{tpu_custom_call.1} parent=5 // pred_fallthru
      _
    %p180 = scmp.lt.s32.totalorder %s13, 2
    // Predicated region
    $region13: #{tpu_custom_call.1} parent=5 // pred_check
      %p181 = pneg %p180
    $region14: #{tpu_custom_call.1} parent=5 // pred_check_branch
      %183 = sbr.rel (%p181) target = $region16
    $region15: #{tpu_custom_call.1} parent=5 // pred_region
      // Predicated region
      $region17: #{tpu_custom_call.1} parent=15 // pred_check
        %p184 = pneg %p47
      $region18: #{tpu_custom_call.1} parent=15 // pred_check_branch
        %186 = sbr.rel (%p184) target = $region20
      $region19: #{tpu_custom_call.1} parent=15 // pred_region
        %s187 = smul.u32 2, %s21
        %p188 = scmp.lt.s32.totalorder %s20, 1
        %s189 = scalar_select %p188, %s20, 1
        %p190 = scmp.lt.s32.totalorder %s187, 1
        %s191 = scalar_select %p190, %s187, 1
        %s192 = smul.addr %s189, 4
        %s193 = sadd.s32 %s191, %s192
        %s194 = smul.addr %s193, 8
        %s195 = scalar_lea.vmem %s1, %s194
        %s196 = smul.u32 2, %s21
      $region20: #{tpu_custom_call.1} parent=15 // pred_fallthru
        _
      // Predicated region
      $region21: #{tpu_custom_call.1} parent=15 // pred_check
        %p197 = pneg %p75
      $region22: #{tpu_custom_call.1} parent=15 // pred_check_branch
        %199 = sbr.rel (%p197) target = $region24
      $region23: #{tpu_custom_call.1} parent=15 // pred_region
        %s200 = smul.u32 2, %s21
        %p201 = scmp.lt.s32.totalorder %s20, 1
        %s202 = scalar_select %p201, %s20, 1
        %p203 = scmp.lt.s32.totalorder %s200, 1
        %s204 = scalar_select %p203, %s200, 1
        %s205 = smul.addr %s202, 2
        %s206 = sadd.s32 %s204, %s205
        %s207 = scalar_lea.vmem %s2, %s206
        %s208 = smul.u32 2, %s21
      $region24: #{tpu_custom_call.1} parent=15 // pred_fallthru
        _
      // Predicated region
      $region25: #{tpu_custom_call.1} parent=15 // pred_check
        %p209 = pneg %p103
      $region26: #{tpu_custom_call.1} parent=15 // pred_check_branch
        %211 = sbr.rel (%p209) target = $region28
      $region27: #{tpu_custom_call.1} parent=15 // pred_region
        %s212 = smul.u32 2, %s21
        %p213 = scmp.lt.s32.totalorder %s20, 1
        %s214 = scalar_select %p213, %s20, 1
        %p215 = scmp.lt.s32.totalorder %s212, 1
        %s216 = scalar_select %p215, %s212, 1
        %s217 = smul.addr %s214, 2
        %s218 = sadd.s32 %s216, %s217
        %s219 = scalar_lea.vmem %s3, %s218
        %s220 = smul.u32 2, %s21
      $region28: #{tpu_custom_call.1} parent=15 // pred_fallthru
        _
    $region16: #{tpu_custom_call.1} parent=5 // pred_fallthru
      _
    %p221 = scmp.le.s32.totalorder 1, %s13
    %p222 = scmp.lt.s32.totalorder %s13, 3
    %p223 = pnand %p221, %p222
    %p224 = pneg %p223
    // Predicated region
    $region29: #{tpu_custom_call.1} parent=5 // pred_check
      _
    $region30: #{tpu_custom_call.1} parent=5 // pred_check_branch
      %226 = sbr.rel (%p223) target = $region32
    $region31: #{tpu_custom_call.1} parent=5 // pred_region
      %s227 = ssub.s32 %s13, 1
      %s228 = smul.u32 2, %s23
      %p229 = scmp.lt.s32.totalorder %s22, 1
      %s230 = scalar_select %p229, %s22, 1
      %p231 = scmp.lt.s32.totalorder %s228, 1
      %s232 = scalar_select %p231, %s228, 1
      %s233 = smul.addr %s230, 4
      %s234 = sadd.s32 %s232, %s233
      %s235 = smul.addr %s234, 8
      %s236 = scalar_lea.vmem %s1, %s235
      %p237 = pneg %p53
      %p238 = pneg %p50
      %s239 = smul.u32 2, %s23
      %p240 = scmp.lt.s32.totalorder %s22, 1
      %s241 = scalar_select %p240, %s22, 1
      %p242 = scmp.lt.s32.totalorder %s239, 1
      %s243 = scalar_select %p242, %s239, 1
      %s244 = smul.addr %s241, 2
      %s245 = sadd.s32 %s243, %s244
      %s246 = scalar_lea.vmem %s2, %s245
      %p247 = pneg %p81
      %p248 = pneg %p78
      %s249 = smul.u32 2, %s23
      %p250 = scmp.lt.s32.totalorder %s22, 1
      %s251 = scalar_select %p250, %s22, 1
      %p252 = scmp.lt.s32.totalorder %s249, 1
      %s253 = scalar_select %p252, %s249, 1
      %s254 = smul.addr %s251, 2
      %s255 = sadd.s32 %s253, %s254
      %s256 = scalar_lea.vmem %s3, %s255
      %p257 = pneg %p109
      %p258 = pneg %p106
      %p259 = pneg %p137
      %p260 = pneg %p134
      %s261 = smul.u32 2, %s23
      %p262 = scmp.lt.s32.totalorder %s22, 1
      %s263 = scalar_select %p262, %s22, 1
      %p264 = scmp.lt.s32.totalorder %s261, 1
      %s265 = scalar_select %p264, %s261, 1
      %s266 = smul.addr %s263, 4
      %s267 = sadd.s32 %s265, %s266
      %s268 = smul.addr %s267, 8
      %s269 = scalar_lea.vmem %s4, %s268
      %p270 = pneg %p165
      %p271 = pneg %p162
      %s272 = smul.u32 2, %s23
      %p273 = scmp.lt.s32.totalorder %s22, 1
      %s274 = scalar_select %p273, %s22, 1
      %p275 = scmp.lt.s32.totalorder %s272, 1
      %s276 = scalar_select %p275, %s272, 1
      %s277 = smul.addr %s274, 4
      %s278 = sadd.s32 %s276, %s277
      %s279 = smul.addr %s278, 8
      %s280 = scalar_lea.vmem %s5, %s279
      %s281 = smul.u32 2, %s23
      %p282 = scmp.lt.s32.totalorder %s22, 1
      %s283 = scalar_select %p282, %s22, 1
      %p284 = scmp.lt.s32.totalorder %s281, 1
      %s285 = scalar_select %p284, %s281, 1
      %s286 = smul.addr %s283, 4
      %s287 = sadd.s32 %s285, %s286
      %s288 = smul.addr %s287, 8
      %s289 = scalar_lea.vmem %s1, %s288
      %s290 = smul.u32 2, %s23
      %s291 = smul.u32 2, %s23
      %p292 = scmp.lt.s32.totalorder %s22, 1
      %s293 = scalar_select %p292, %s22, 1
      %p294 = scmp.lt.s32.totalorder %s291, 1
      %s295 = scalar_select %p294, %s291, 1
      %s296 = smul.addr %s293, 2
      %s297 = sadd.s32 %s295, %s296
      %s298 = scalar_lea.vmem %s2, %s297
      %s299 = smul.u32 2, %s23
      %s300 = smul.u32 2, %s23
      %p301 = scmp.lt.s32.totalorder %s22, 1
      %s302 = scalar_select %p301, %s22, 1
      %p303 = scmp.lt.s32.totalorder %s300, 1
      %s304 = scalar_select %p303, %s300, 1
      %s305 = smul.addr %s302, 2
      %s306 = sadd.s32 %s304, %s305
      %s307 = scalar_lea.vmem %s3, %s306
      %s308 = smul.u32 2, %s23
      %s309 = smul.u32 2, %s23
      %p310 = scmp.lt.s32.totalorder %s22, 1
      %s311 = scalar_select %p310, %s22, 1
      %p312 = scmp.lt.s32.totalorder %s309, 1
      %s313 = scalar_select %p312, %s309, 1
      %s314 = smul.addr %s311, 4
      %s315 = sadd.s32 %s313, %s314
      %s316 = smul.addr %s315, 8
      %s317 = scalar_lea.vmem %s4, %s316
      %s318 = smul.u32 2, %s23
      %s319 = smul.u32 2, %s23
      %p320 = scmp.lt.s32.totalorder %s22, 1
      %s321 = scalar_select %p320, %s22, 1
      %p322 = scmp.lt.s32.totalorder %s319, 1
      %s323 = scalar_select %p322, %s319, 1
      %s324 = smul.addr %s321, 4
      %s325 = sadd.s32 %s323, %s324
      %s326 = smul.addr %s325, 8
      %s327 = scalar_lea.vmem %s5, %s326
      %s328 = smul.u32 2, %s23
      %v329 = vld [vmem:[%s289] sm:$0xff]
      %v330 = vld [vmem:[%s289 + $0x8] sm:$0xff]
      %v331 = vld [vmem:[%s289 + $0x10] sm:$0x3]
      %v332 = vld [vmem:[%s289 + $0x18] sm:$0x3]
      %v333 = vshrl.u32 %v329, 8
      %v334 = vshrl.u32 %v330, 8
      %v335 = vshrl.u32 %v331, 8
      %v336 = vshrl.u32 %v332, 8
      %v337 = vshrl.u32 %v333, 16
      %v338 = vand.u32 %v333, 65535
      %v339 = vcvt.s32.f32 %v337
      %v340 = vmul.f32 %v339, 65536.0
      %v341 = vcvt.s32.f32 %v338
      %v342 = vadd.f32 %v340, %v341
      %v343 = vshrl.u32 %v334, 16
      %v344 = vand.u32 %v334, 65535
      %v345 = vcvt.s32.f32 %v343
      %v346 = vmul.f32 %v345, 65536.0
      %v347 = vcvt.s32.f32 %v344
      %v348 = vadd.f32 %v346, %v347
      %v349 = vshrl.u32 %v335, 16
      %v350 = vand.u32 %v335, 65535
      %v351 = vcvt.s32.f32 %v349
      %v352 = vmul.f32 %v351, 65536.0
      %v353 = vcvt.s32.f32 %v350
      %v354 = vadd.f32 %v352, %v353
      %v355 = vshrl.u32 %v336, 16
      %v356 = vand.u32 %v336, 65535
      %v357 = vcvt.s32.f32 %v355
      %v358 = vmul.f32 %v357, 65536.0
      %v359 = vcvt.s32.f32 %v356
      %v360 = vadd.f32 %v358, %v359
      %v361 = vmul.f32 %v342, 5.9604645e-08
      %v362 = vmul.f32 %v348, 5.9604645e-08
      %v363 = vmul.f32 %v354, 5.9604645e-08
      %v364 = vmul.f32 %v360, 5.9604645e-08
      %365 = vst [vmem:[%s317] sm:$0xff] %v361
      %366 = vst [vmem:[%s317 + $0x8] sm:$0xff] %v362
      %367 = vst [vmem:[%s317 + $0x10] sm:$0x3] %v363
      %368 = vst [vmem:[%s317 + $0x18] sm:$0x3] %v364
      %v369 = vld [vmem:[%s298] sm:$0x3]
      %v370 = vld [vmem:[%s307] sm:$0x3]
      %v371 = vsub.f32 %v370, %v369
      %v372 = vmul.f32 %v371, 0.1
      %v373 = vlaneseq
      %v374 = vshrl.u32 %v373, 7
      %v375 = vadd.s32 %v374, 8
      %v376 = vcvt.s32.f32 %v374
      %v377 = vcvt.s32.f32 %v375
      %v379 = vlaneseq
      %v380 = vshrl.u32 %v379, 7
      %v381 = vsub.s32 0, %v380
      %v382 = vrot.slane %v372, %v381
      %v383 = vlaneseq
      %v384 = vshrl.u32 %v383, 7
      %v385 = vsub.s32 1, %v384
      %v386 = vrot.slane %v372, %v385
      %v389 = vmul.f32 %v382, %v376
      %v390 = vmul.f32 %v386, %v376
      %v391 = vmul.f32 %v382, %v377
      %v392 = vmul.f32 %v386, %v377
      %v394 = vlaneseq
      %v395 = vshrl.u32 %v394, 7
      %v396 = vsub.s32 0, %v395
      %v397 = vrot.slane %v369, %v396
      %v398 = vlaneseq
      %v399 = vshrl.u32 %v398, 7
      %v400 = vsub.s32 1, %v399
      %v401 = vrot.slane %v369, %v400
      %v404 = vadd.f32 %v397, %v389
      %v405 = vadd.f32 %v401, %v390
      %v406 = vadd.f32 %v397, %v391
      %v407 = vadd.f32 %v401, %v392
      %408 = vst [vmem:[%s327] sm:$0xff] %v404
      %409 = vst [vmem:[%s327 + $0x8] sm:$0xff] %v405
      %410 = vst [vmem:[%s327 + $0x10] sm:$0x3] %v406
      %411 = vst [vmem:[%s327 + $0x18] sm:$0x3] %v407
      %s412 = smul.u32 2, %s23
      %p413 = scmp.lt.s32.totalorder %s22, 1
      %s414 = scalar_select %p413, %s22, 1
      %p415 = scmp.lt.s32.totalorder %s412, 1
      %s416 = scalar_select %p415, %s412, 1
      %s417 = smul.addr %s414, 4
      %s418 = sadd.s32 %s416, %s417
      %s419 = smul.addr %s418, 8
      %s420 = scalar_lea.vmem %s4, %s419
      %s421 = smul.u32 2, %s23
      %p422 = scmp.lt.s32.totalorder %s22, 1
      %s423 = scalar_select %p422, %s22, 1
      %p424 = scmp.lt.s32.totalorder %s421, 1
      %s425 = scalar_select %p424, %s421, 1
      %s426 = smul.addr %s423, 4
      %s427 = sadd.s32 %s425, %s426
      %s428 = smul.addr %s427, 8
      %s429 = scalar_lea.vmem %s5, %s428
      // Predicated region
      $region33: #{tpu_custom_call.1} parent=31 // pred_check
        %p430 = pneg %p134
      $region34: #{tpu_custom_call.1} parent=31 // pred_check_branch
        %432 = sbr.rel (%p430) target = $region36
      $region35: #{tpu_custom_call.1} parent=31 // pred_region
        %s433 = smul.u32 2, %s23
      $region36: #{tpu_custom_call.1} parent=31 // pred_fallthru
        _
      // Predicated region
      $region37: #{tpu_custom_call.1} parent=31 // pred_check
        %p434 = pneg %p162
      $region38: #{tpu_custom_call.1} parent=31 // pred_check_branch
        %436 = sbr.rel (%p434) target = $region40
      $region39: #{tpu_custom_call.1} parent=31 // pred_region
        %s437 = smul.u32 2, %s23
      $region40: #{tpu_custom_call.1} parent=31 // pred_fallthru
        _
    $region32: #{tpu_custom_call.1} parent=5 // pred_fallthru
      _
    %p438 = scmp.le.s32.totalorder 2, %s13
    // Predicated region
    $region41: #{tpu_custom_call.1} parent=5 // pred_check
      %p439 = pneg %p438
    $region42: #{tpu_custom_call.1} parent=5 // pred_check_branch
      %441 = sbr.rel (%p439) target = $region44
    $region43: #{tpu_custom_call.1} parent=5 // pred_region
      %s442 = ssub.s32 %s13, 2
      // Predicated region
      $region45: #{tpu_custom_call.1} parent=43 // pred_check
        %p443 = pneg %p140
      $region46: #{tpu_custom_call.1} parent=43 // pred_check_branch
        %445 = sbr.rel (%p443) target = $region48
      $region47: #{tpu_custom_call.1} parent=43 // pred_region
        %s446 = smul.u32 2, %s25
        %p447 = scmp.lt.s32.totalorder %s24, 1
        %s448 = scalar_select %p447, %s24, 1
        %p449 = scmp.lt.s32.totalorder %s446, 1
        %s450 = scalar_select %p449, %s446, 1
        %s451 = smul.addr %s448, 4
        %s452 = sadd.s32 %s450, %s451
        %s453 = smul.addr %s452, 8
        %s454 = scalar_lea.vmem %s4, %s453
      $region48: #{tpu_custom_call.1} parent=43 // pred_fallthru
        _
      // Predicated region
      $region49: #{tpu_custom_call.1} parent=43 // pred_check
        %p455 = pneg %p168
      $region50: #{tpu_custom_call.1} parent=43 // pred_check_branch
        %457 = sbr.rel (%p455) target = $region52
      $region51: #{tpu_custom_call.1} parent=43 // pred_region
        %s458 = smul.u32 2, %s25
        %p459 = scmp.lt.s32.totalorder %s24, 1
        %s460 = scalar_select %p459, %s24, 1
        %p461 = scmp.lt.s32.totalorder %s458, 1
        %s462 = scalar_select %p461, %s458, 1
        %s463 = smul.addr %s460, 4
        %s464 = sadd.s32 %s462, %s463
        %s465 = smul.addr %s464, 8
        %s466 = scalar_lea.vmem %s5, %s465
      $region52: #{tpu_custom_call.1} parent=43 // pred_fallthru
        _
    $region44: #{tpu_custom_call.1} parent=5 // pred_fallthru
      _
  $region6: #{tpu_custom_call.1} parent=0 // loop_footer
    %s17 = sadd.s32 1, %s13
  $region7: #{tpu_custom_call.1} parent=0 // loop_footer_branch
    %12 = sbr.rel target = $region3
  $region8: #{tpu_custom_call.1} parent=0 // loop_exit
    _

</llo_original>
